<compile_context>
chip_gen: v7x
topology: tpu7x:2x2x1
jax: 0.10.0
libtpu: 0.0.40
codegen_flags: <defaults>
</compile_context>

<pallas_src>
import functools
from math import ceil

import jax
import jax.numpy as jnp
from jax.experimental import pallas as pl
from jax.experimental.pallas import tpu as pltpu


def conv_bn_kernel(x_ref, w_ref, p_ref, o_ref, *, K, stride, pad, eps):
    """Fused Conv1d + training-mode BatchNorm1d (single invocation, no grid).

    x_ref: (N, C_in, L)       natural layout, unpadded input
    w_ref: (C_out, K*C_in)    im2col-ordered weights (k-major, c-minor)
    p_ref: (C_out, 2)         packed [gamma, beta]
    o_ref: (N, C_out, L_out)  natural layout output
    """
    N, C_in, L = x_ref.shape
    L_out = o_ref.shape[2]
    span = stride * (L_out - 1) + 1

    x = x_ref[...]                         # (N, C_in, L)
    w = w_ref[...]                         # (C_out, K*C_in)
    params = p_ref[...]
    gamma = params[:, 0:1]                 # (C_out, 1)
    beta = params[:, 1:2]                  # (C_out, 1)

    # ---- zero-pad each batch along length in VMEM (static concats) ----
    zpad = jnp.zeros((C_in, pad), dtype=x.dtype)
    xp = [jnp.concatenate([zpad, x[n], zpad], axis=1) for n in range(N)]  # (C_in, L_pad)

    # ---- im2col RHS: batch folded into lanes, taps stacked on sublanes ----
    rows = []
    for k in range(K):
        tap = jnp.concatenate(
            [xp[n][:, k: k + span: stride] for n in range(N)], axis=1
        )                                   # (C_in, N*L_out)
        rows.append(tap)
    cols = jnp.concatenate(rows, axis=0)    # (K*C_in, N*L_out)

    # ---- Conv1d: one MXU matmul, fp32 accumulation. Conv bias omitted: it is
    #      exactly cancelled by the training-mode BN mean subtraction. ----
    y = jnp.dot(w, cols, preferred_element_type=jnp.float32)   # (C_out, N*L_out)

    # ---- BatchNorm1d: one-pass biased batch statistics over (N, L_out) ----
    inv_m = 1.0 / (N * L_out)
    s = jnp.sum(y, axis=1, keepdims=True)          # (C_out, 1)
    ss = jnp.sum(y * y, axis=1, keepdims=True)     # (C_out, 1)
    mean = s * inv_m
    var = ss * inv_m - mean * mean
    inv_std = jax.lax.rsqrt(var + eps)
    scale = gamma * inv_std                        # (C_out, 1)
    shift = beta - mean * scale                    # (C_out, 1)
    y_hat = y * scale + shift                      # (C_out, N*L_out)

    # ---- un-fold lanes: per-batch static slice -> natural-layout store ----
    for n in range(N):
        o_ref[n, :, :] = y_hat[:, n * L_out:(n + 1) * L_out].astype(o_ref.dtype)


def conv_layer_forward(x, weight, bias, gamma, beta, *, stride, pad, eps=1e-5):
    del bias  # cancelled exactly by training-mode BatchNorm (see header note)
    N, C_in, L = x.shape
    C_out, _, K = weight.shape
    L_out = (L + 2 * pad - K) // stride + 1

    # Parameter prep only (data-independent; precomputable once per step):
    #   weight -> (C_out, K*C_in), row order matched to the kernel's im2col;
    #   gamma/beta packed into one (C_out, 2) tile (single tiny VMEM input).
    w2 = jnp.transpose(weight, (0, 2, 1)).reshape(C_out, K * C_in)
    params = jnp.stack([gamma, beta], axis=1).astype(jnp.float32)

    kernel = functools.partial(conv_bn_kernel, K=K, stride=stride, pad=pad, eps=eps)
    vmem = pl.BlockSpec(memory_space=pltpu.MemorySpace.VMEM)
    return pl.pallas_call(
        kernel,
        out_shape=jax.ShapeDtypeStruct((N, C_out, L_out), x.dtype),
        in_specs=[vmem, vmem, vmem],
        out_specs=vmem,
    )(x, w2, params)


def reference_forward(x, weight, bias, gamma, beta, *, stride, pad, eps=1e-5):
    """Pure-JAX reference: Conv1d (with bias) + BatchNorm1d (training-mode)."""
    y = jax.lax.conv_general_dilated(
        x, weight,
        window_strides=(stride,),
        padding=[(pad, pad)],
        dimension_numbers=("NCH", "OIH", "NCH"),
    ) + bias[None, :, None]
    mean = jnp.mean(y, axis=(0, 2), keepdims=True)
    var = jnp.mean((y - mean) ** 2, axis=(0, 2), keepdims=True)
    y_hat = (y - mean) * jax.lax.rsqrt(var + eps)
    return gamma[None, :, None] * y_hat + beta[None, :, None]


if __name__ == "__main__":
    # Module config
    input_channels, output_channels = 4, 8
    kernel_size, stride = 3, 1
    pad = max(kernel_size - stride, ceil((stride - 1) / 2))  # padding='fair'

    # Deterministic inputs / parameters (PyTorch-like BN defaults)
    key = jax.random.PRNGKey(0)
    kx, kw, kb = jax.random.split(key, 3)
    batch, length = 2, 16
    x = jax.random.normal(kx, (batch, input_channels, length), dtype=jnp.float32)
    weight = (jax.random.normal(kw, (output_channels, input_channels, kernel_size),
                                dtype=jnp.float32) * 0.1)
    bias = jax.random.normal(kb, (output_channels,), dtype=jnp.float32) * 0.1
    gamma = jnp.ones((output_channels,), dtype=jnp.float32)   # BN weight
    beta = jnp.zeros((output_channels,), dtype=jnp.float32)   # BN bias

    out = conv_layer_forward(x, weight, bias, gamma, beta, stride=stride, pad=pad)
    out = jax.block_until_ready(out)

    ref = reference_forward(x, weight, bias, gamma, beta, stride=stride, pad=pad)
    assert out.shape == ref.shape, (out.shape, ref.shape)
    assert jnp.allclose(out, ref, atol=1e-3, rtol=1e-3), float(jnp.max(jnp.abs(out - ref)))

    print("KERNEL_OK")
</pallas_src>

<mosaic_0001>
module attributes {stable_mosaic.version = 11 : i64} {
  func.func @conv_bn_kernel(%arg0: memref<2x4x16xf32, #tpu.memory_space<vmem>>, %arg1: memref<8x12xf32, #tpu.memory_space<vmem>>, %arg2: memref<8x2xf32, #tpu.memory_space<vmem>>, %arg3: memref<2x8x18xf32, #tpu.memory_space<vmem>>) attributes {dimension_semantics = [], scalar_prefetch = 0 : i64, scratch_operands = 0 : i64, tpu.core_type = #tpu.core_type<tc>} {
    %c0 = arith.constant 0 : index
    %c0_0 = arith.constant 0 : index
    %c0_1 = arith.constant 0 : index
    %0 = vector.load %arg0[%c0, %c0_0, %c0_1] : memref<2x4x16xf32, #tpu.memory_space<vmem>>, vector<2x4x16xf32>
    %c0_2 = arith.constant 0 : index
    %c0_3 = arith.constant 0 : index
    %1 = vector.load %arg1[%c0_2, %c0_3] : memref<8x12xf32, #tpu.memory_space<vmem>>, vector<8x12xf32>
    %c0_4 = arith.constant 0 : index
    %c0_5 = arith.constant 0 : index
    %2 = vector.load %arg2[%c0_4, %c0_5] : memref<8x2xf32, #tpu.memory_space<vmem>>, vector<8x2xf32>
    %3 = vector.extract_strided_slice %2 {offsets = [0, 0], sizes = [8, 1], strides = [1, 1]} : vector<8x2xf32> to vector<8x1xf32>
    %4 = vector.extract_strided_slice %2 {offsets = [0, 1], sizes = [8, 1], strides = [1, 1]} : vector<8x2xf32> to vector<8x1xf32>
    %cst = arith.constant 0.000000e+00 : f32
    %5 = vector.broadcast %cst : f32 to vector<4x2xf32>
    %6 = vector.extract_strided_slice %0 {offsets = [0, 0, 0], sizes = [1, 4, 16], strides = [1, 1, 1]} : vector<2x4x16xf32> to vector<1x4x16xf32>
    %7 = vector.shape_cast %6 : vector<1x4x16xf32> to vector<4x16xf32>
    %8 = tpu.concatenate %5, %7, %5 in 1 : vector<4x2xf32>, vector<4x16xf32>, vector<4x2xf32> -> vector<4x20xf32>
    %9 = vector.extract_strided_slice %0 {offsets = [1, 0, 0], sizes = [1, 4, 16], strides = [1, 1, 1]} : vector<2x4x16xf32> to vector<1x4x16xf32>
    %10 = vector.shape_cast %9 : vector<1x4x16xf32> to vector<4x16xf32>
    %11 = tpu.concatenate %5, %10, %5 in 1 : vector<4x2xf32>, vector<4x16xf32>, vector<4x2xf32> -> vector<4x20xf32>
    %12 = vector.extract_strided_slice %8 {offsets = [0, 0], sizes = [4, 18], strides = [1, 1]} : vector<4x20xf32> to vector<4x18xf32>
    %13 = vector.extract_strided_slice %11 {offsets = [0, 0], sizes = [4, 18], strides = [1, 1]} : vector<4x20xf32> to vector<4x18xf32>
    %14 = tpu.concatenate %12, %13 in 1 : vector<4x18xf32>, vector<4x18xf32> -> vector<4x36xf32>
    %15 = vector.extract_strided_slice %8 {offsets = [0, 1], sizes = [4, 18], strides = [1, 1]} : vector<4x20xf32> to vector<4x18xf32>
    %16 = vector.extract_strided_slice %11 {offsets = [0, 1], sizes = [4, 18], strides = [1, 1]} : vector<4x20xf32> to vector<4x18xf32>
    %17 = tpu.concatenate %15, %16 in 1 : vector<4x18xf32>, vector<4x18xf32> -> vector<4x36xf32>
    %18 = vector.extract_strided_slice %8 {offsets = [0, 2], sizes = [4, 18], strides = [1, 1]} : vector<4x20xf32> to vector<4x18xf32>
    %19 = vector.extract_strided_slice %11 {offsets = [0, 2], sizes = [4, 18], strides = [1, 1]} : vector<4x20xf32> to vector<4x18xf32>
    %20 = tpu.concatenate %18, %19 in 1 : vector<4x18xf32>, vector<4x18xf32> -> vector<4x36xf32>
    %21 = tpu.concatenate %14, %17, %20 in 0 : vector<4x36xf32>, vector<4x36xf32>, vector<4x36xf32> -> vector<12x36xf32>
    %cst_6 = arith.constant dense<0.000000e+00> : vector<8x36xf32>
    %22 = tpu.matmul %1, %21, %cst_6 {dimension_numbers = #tpu.dot_dimension_numbers<[1], [0], [0], [1], [0, 0, 1, 1], [], []>} : vector<8x12xf32>, vector<12x36xf32>, vector<8x36xf32> -> vector<8x36xf32>
    %cst_7 = arith.constant dense<0.000000e+00> : vector<8xf32>
    %23 = vector.multi_reduction <add>, %22, %cst_7 [1] : vector<8x36xf32> to vector<8xf32>
    %24 = vector.shape_cast %23 : vector<8xf32> to vector<8x1xf32>
    %25 = arith.mulf %22, %22 : vector<8x36xf32>
    %cst_8 = arith.constant dense<0.000000e+00> : vector<8xf32>
    %26 = vector.multi_reduction <add>, %25, %cst_8 [1] : vector<8x36xf32> to vector<8xf32>
    %27 = vector.shape_cast %26 : vector<8xf32> to vector<8x1xf32>
    %cst_9 = arith.constant 0.027777778 : f32
    %28 = vector.broadcast %cst_9 : f32 to vector<8x1xf32>
    %29 = arith.mulf %24, %28 : vector<8x1xf32>
    %cst_10 = arith.constant 0.027777778 : f32
    %30 = vector.broadcast %cst_10 : f32 to vector<8x1xf32>
    %31 = arith.mulf %27, %30 : vector<8x1xf32>
    %32 = arith.mulf %29, %29 : vector<8x1xf32>
    %33 = arith.subf %31, %32 : vector<8x1xf32>
    %cst_11 = arith.constant 9.99999974E-6 : f32
    %34 = vector.broadcast %cst_11 : f32 to vector<8x1xf32>
    %35 = arith.addf %33, %34 : vector<8x1xf32>
    %36 = math.rsqrt %35 : vector<8x1xf32>
    %37 = arith.mulf %3, %36 : vector<8x1xf32>
    %38 = arith.mulf %29, %37 : vector<8x1xf32>
    %39 = arith.subf %4, %38 : vector<8x1xf32>
    %40 = vector.broadcast %37 : vector<8x1xf32> to vector<8x36xf32>
    %41 = arith.mulf %22, %40 : vector<8x36xf32>
    %42 = vector.broadcast %39 : vector<8x1xf32> to vector<8x36xf32>
    %43 = arith.addf %41, %42 : vector<8x36xf32>
    %44 = vector.extract_strided_slice %43 {offsets = [0, 0], sizes = [8, 18], strides = [1, 1]} : vector<8x36xf32> to vector<8x18xf32>
    %c0_12 = arith.constant 0 : index
    %c0_13 = arith.constant 0 : index
    %c0_14 = arith.constant 0 : index
    %45 = vector.load %arg3[%c0_12, %c0_13, %c0_14] : memref<2x8x18xf32, #tpu.memory_space<vmem>>, vector<1x8x18xf32>
    %46 = vector.shape_cast %45 : vector<1x8x18xf32> to vector<8x18xf32>
    %47 = vector.shape_cast %44 : vector<8x18xf32> to vector<1x8x18xf32>
    tpu.vector_store %arg3[%c0_12, %c0_13, %c0_14], %47 {strides = array<i32>} : memref<2x8x18xf32, #tpu.memory_space<vmem>>, vector<1x8x18xf32>,
    %48 = vector.extract_strided_slice %43 {offsets = [0, 18], sizes = [8, 18], strides = [1, 1]} : vector<8x36xf32> to vector<8x18xf32>
    %c1 = arith.constant 1 : index
    %c0_15 = arith.constant 0 : index
    %c0_16 = arith.constant 0 : index
    %49 = vector.load %arg3[%c1, %c0_15, %c0_16] : memref<2x8x18xf32, #tpu.memory_space<vmem>>, vector<1x8x18xf32>
    %50 = vector.shape_cast %49 : vector<1x8x18xf32> to vector<8x18xf32>
    %51 = vector.shape_cast %48 : vector<8x18xf32> to vector<1x8x18xf32>
    tpu.vector_store %arg3[%c1, %c0_15, %c0_16], %51 {strides = array<i32>} : memref<2x8x18xf32, #tpu.memory_space<vmem>>, vector<1x8x18xf32>,
    return
  }
}

</mosaic_0001>

<llo_original>
// kernel: tpu_custom_call.1
$region0: #{tpu_custom_call.1}
  #allocation0 [shape = 'u32[]', space=smem, size = 0x4, offset = 0x4, fixed_abs, tag = 'smem constant byte address 0x4 - core index']
  #allocation1 [shape = 'u32[144,128]{1,0:T(1,128)}', space=vmem, size = 0x12000, scoped, tag = 'internal scratch']
  %s0 = inlined_call_operand.vmem [shape: f32[2,4,16], index: 0, kind: input, shape index: {}]
  %s1 = inlined_call_operand.hbm [shape: f32[8,12], index: 1, kind: input, shape index: {}]
  %s2 = inlined_call_operand.vmem [shape: f32[8,2], index: 2, kind: input, shape index: {}]
  %s3 = inlined_call_operand.hbm [shape: f32[2,8,18], index: 3, kind: output, shape index: {}]
  %s4 = sld [smem:[#allocation0]]
  $region26: #{tpu_custom_call.1} parent=0
    _
  %s6 = ssub.s32 1, %s4
  %s7 = scalar_select 0, %s6, %s4
  $region1: #{tpu_custom_call.1} parent=0
    #allocation2 [shape = 'u8[4096]{0}', space=vmem, size = 0x1000, scoped, tag = 'input window, operand 1, single buffered']
    #allocation3 [shape = 's32[1]{0}', space=sflag, size = 0x4, scoped, tag = 'scoped memory for tpu_custom_call.1']
    #allocation4 [shape = 's32[1]{0}', space=sflag, size = 0x4, scoped, tag = 'scoped memory for tpu_custom_call.1']
    #allocation5 [shape = 'u8[8192]{0}', space=vmem, size = 0x2000, scoped, tag = 'output window, operand 0, single buffered']
    %8 = vsyncpa [#allocation3], 0
    %9 = vsyncpa [#allocation4], 0
    // Predicated region
    $region2: #{tpu_custom_call.1} parent=1 // pred_check
      _
    $region3: #{tpu_custom_call.1} parent=1 // pred_check_branch
      %11 = sbr.rel (0) target = $region5
    $region4: #{tpu_custom_call.1} parent=1 // pred_region
      _
    $region5: #{tpu_custom_call.1} parent=1 // pred_fallthru
      _
    // Predicated region
    $region6: #{tpu_custom_call.1} parent=1 // pred_check
      _
    $region7: #{tpu_custom_call.1} parent=1 // pred_check_branch
      %13 = sbr.rel (0) target = $region9
    $region8: #{tpu_custom_call.1} parent=1 // pred_region
      %s15 = ssub.s32 128, 128
      %16 = vsyncadd [#allocation3], %s15
      %s18 = sshll.u32 [#allocation2], 4
      %s19 = int_to_ptr.vmem [resolvable:$true] %s18
      %21 = dma.hbm_to_vmem [thread:$0]  %s1, 128, %s19, [#allocation3]
    $region9: #{tpu_custom_call.1} parent=1 // pred_fallthru
      _
    // Predicated region
    $region10: #{tpu_custom_call.1} parent=1 // pred_check
      _
    $region11: #{tpu_custom_call.1} parent=1 // pred_check_branch
      %23 = sbr.rel (0) target = $region13
    $region12: #{tpu_custom_call.1} parent=1 // pred_region
      _
    $region13: #{tpu_custom_call.1} parent=1 // pred_fallthru
      _
    // Predicated region
    $region14: #{tpu_custom_call.1} parent=1 // pred_check
      _
    $region15: #{tpu_custom_call.1} parent=1 // pred_check_branch
      %25 = sbr.rel (0) target = $region17
    $region16: #{tpu_custom_call.1} parent=1 // pred_region
      %26 = dma.done [#allocation3], 128
    $region17: #{tpu_custom_call.1} parent=1 // pred_fallthru
      _
    %v27 = vld [vmem:[%s0] sm:$0xf]
    %v28 = vld [vmem:[%s0 + $0x4] sm:$0xf]
    %v29 = vld [vmem:[#allocation2] sm:$0xff]
    %v30 = vld [vmem:[%s2] sm:$0xff]
    %32 = vrot.lane.b32.xlu0 %v27, 2
    %v33 = vpop.permute.xlu0 %32
    %vm35 = vcmask 15360
    %v36 = vsel %vm35, 0.0, %v33
    %vm37 = vcmask 146432
    %v38 = vsel %vm37, %v36, 0.0
    %40 = vrot.lane.b32.xlu0 %v28, 2
    %v41 = vpop.permute.xlu0 %40
    %v43 = vsel %vm35, 0.0, %v41
    %v44 = vsel %vm37, %v43, 0.0
    %46 = vrot.lane.b32.xlu0 %v44, 18
    %v47 = vpop.permute.xlu0 %46
    %v49 = vsel %vm37, %v38, %v47
    %51 = vrot.lane.b32.xlu0 %v38, 127
    %v52 = vpop.permute.xlu0 %51
    %54 = vrot.lane.b32.xlu0 %v44, 17
    %v55 = vpop.permute.xlu0 %54
    %v57 = vsel %vm37, %v52, %v55
    %58 = vrot.lane.b32.xlu0 %v38, 126
    %v59 = vpop.permute.xlu0 %58
    %61 = vrot.lane.b32.xlu0 %v44, 16
    %v62 = vpop.permute.xlu0 %61
    %v64 = vsel %vm37, %v59, %v62
    %v66 = vrot.slane %v57, 4
    %vm68 = vcmask 1043456
    %v69 = vsel %vm68, %v49, %v66
    %vm70 = vcmask 97280
    %v72 = vsel %vm70, %v29, 0
    %v75 = vsel %vm68, %v64, 0
    %77 = vmatprep.subr.mxu0 0.0
    %78 = vmatpush1.msra.mxu0 %v69
    %79 = vmatprep.subr.mxu0 0.0
    %80 = vmatpush1.msra.mxu0 %v75
    %81 = vmatprep.subr.mxu0 0.0
    %82 = vmatpush1.msra.mxu0 0.0
    %83 = vmatprep.subr.mxu0 0.0
    %84 = vmatpush1.msra.mxu0 0.0
    %85 = vmatprep.subr.mxu0 0.0
    %86 = vmatpush1.msra.mxu0 0.0
    %87 = vmatprep.subr.mxu0 0.0
    %88 = vmatpush1.msra.mxu0 0.0
    %89 = vmatprep.subr.mxu0 0.0
    %90 = vmatpush1.msra.mxu0 0.0
    %91 = vmatprep.subr.mxu0 0.0
    %92 = vmatpush1.msra.mxu0 0.0
    %93 = vmatprep.subr.mxu0 0.0
    %94 = vmatpush1.msra.mxu0 0.0
    %95 = vmatprep.subr.mxu0 0.0
    %96 = vmatpush1.msra.mxu0 0.0
    %97 = vmatprep.subr.mxu0 0.0
    %98 = vmatpush1.msra.mxu0 0.0
    %99 = vmatprep.subr.mxu0 0.0
    %100 = vmatpush1.msra.mxu0 0.0
    %101 = vmatprep.subr.mxu0 0.0
    %102 = vmatpush1.msra.mxu0 0.0
    %103 = vmatprep.subr.mxu0 0.0
    %104 = vmatpush1.msra.mxu0 0.0
    %105 = vmatprep.subr.mxu0 0.0
    %106 = vmatpush1.msra.mxu0 0.0
    %107 = vmatprep.subr.mxu0 0.0
    %108 = vmatpush1.msra.mxu0 0.0
    %109 = vmatprep.subr.mxu0 0.0
    %110 = vmatpush1.msra.mxu0 0.0
    %111 = vmatprep.subr.mxu0 0.0
    %112 = vmatpush1.msra.mxu0 0.0
    %113 = vmatprep.subr.mxu0 0.0
    %114 = vmatpush1.msra.mxu0 0.0
    %115 = vmatprep.subr.mxu0 0.0
    %116 = vmatpush1.msra.mxu0 0.0
    %117 = vmatprep.subr.mxu0 0.0
    %118 = vmatpush1.msra.mxu0 0.0
    %119 = vmatprep.subr.mxu0 0.0
    %120 = vmatpush1.msra.mxu0 0.0
    %121 = vmatprep.subr.mxu0 0.0
    %122 = vmatpush1.msra.mxu0 0.0
    %123 = vmatprep.subr.mxu0 0.0
    %124 = vmatpush1.msra.mxu0 0.0
    %125 = vmatprep.subr.mxu0 0.0
    %126 = vmatpush1.msra.mxu0 0.0
    %127 = vmatprep.subr.mxu0 0.0
    %128 = vmatpush1.msra.mxu0 0.0
    %129 = vmatprep.subr.mxu0 0.0
    %130 = vmatpush1.msra.mxu0 0.0
    %131 = vmatprep.subr.mxu0 0.0
    %132 = vmatpush1.msra.mxu0 0.0
    %133 = vmatprep.subr.mxu0 0.0
    %134 = vmatpush1.msra.mxu0 0.0
    %135 = vmatprep.subr.mxu0 0.0
    %136 = vmatpush1.msra.mxu0 0.0
    %137 = vmatprep.subr.mxu0 0.0
    %138 = vmatpush1.msra.mxu0 0.0
    %139 = vmatprep.subr.mxu0 0.0
    %140 = vmatpush1.msra.mxu0 0.0
    %141 = vmatprep.mubr.f32.mxu0 0.0
    %142 = vmatmul.mubr.f32.gmra.mrb[0].mxu0 %v72
    %v143 = vpop.f32.mrb[0].mxu0
    %v144 = vadd.f32 0.0, %v143
    %v145 = vpop.f32.mrb[0].mxu0
    %146 = vdwg.mxu0
    %vm147 = vcmask 293888
    %v148 = vsel %vm147, %v144, 0.0
    %149 = vadd.xlane.f32.xlu0 %v148
    %v150 = vpop.xlane.xlu0 %149
    %v151 = vmul.f32 %v144, %v144
    %v152 = vsel %vm147, %v151, 0.0
    %153 = vadd.xlane.f32.xlu0 %v152
    %v154 = vpop.xlane.xlu0 %153
    %v155 = vmul.f32 %v150, 0.027777778
    %v156 = vmul.f32 %v154, 0.027777778
    %v157 = vmul.f32 %v155, %v155
    %v158 = vsub.f32 %v156, %v157
    %v159 = vadd.f32 %v158, 1e-05
    %v160 = vrsqrt.pop %v159
    %v161 = vmul.f32 %v30, %v160
    %v162 = vmul.f32 %v155, %v161
    %164 = vrot.lane.b32.xlu0 %v162, 1
    %v165 = vpop.permute.xlu0 %164
    %v167 = vsub.f32 %v30, %v165
    %169 = vset.pattern.permute.xlu0 0
    %170 = vperm.xlu0 %169, %v161
    %v171 = vpop.permute.xlu0 %170
    %v173 = vmul.f32 %v144, %v171
    %175 = vset.pattern.permute.xlu0 1
    %176 = vperm.xlu0 %175, %v167
    %v177 = vpop.permute.xlu0 %176
    %v179 = vadd.f32 %v173, %v177
    %180 = vst.msk [vmem:[#allocation5] sm:$0xff] %vm37, %v179
    %182 = vrot.lane.b32.xlu0 %v179, 110
    %v183 = vpop.permute.xlu0 %182
    %s185 = scalar_lea.vmem [#allocation5], 8
    %186 = vst.msk [vmem:[%s185] sm:$0xff] %vm37, %v183
    // Predicated region
    $region18: #{tpu_custom_call.1} parent=1 // pred_check
      _
    $region19: #{tpu_custom_call.1} parent=1 // pred_check_branch
      %188 = sbr.rel (0) target = $region21
    $region20: #{tpu_custom_call.1} parent=1 // pred_region
      %s190 = ssub.s32 256, 256
      %191 = vsyncadd [#allocation4], %s190
      %s192 = sshll.u32 [#allocation5], 4
      %s193 = int_to_ptr.vmem [resolvable:$true] %s192
      %198 = dma.vmem_to_hbm [thread:$0]  %s193, 256, %s3, [#allocation4], 128, 128, 8
    $region21: #{tpu_custom_call.1} parent=1 // pred_fallthru
      _
    // Predicated region
    $region22: #{tpu_custom_call.1} parent=1 // pred_check
      _
    $region23: #{tpu_custom_call.1} parent=1 // pred_check_branch
      %200 = sbr.rel (0) target = $region25
    $region24: #{tpu_custom_call.1} parent=1 // pred_region
      %201 = dma.done [#allocation4], 256
    $region25: #{tpu_custom_call.1} parent=1 // pred_fallthru
      _
    %202 = vsyncpa [#allocation3], 1
    %203 = vsyncpa [#allocation4], 1

</llo_original>
